<compile_context>
chip_gen: v6e
topology: v6e:2x2x1
jax: 0.10.0
libtpu: 0.0.40
codegen_flags: <defaults>
</compile_context>

<pallas_src>
import jax
import jax.numpy as jnp
from jax import lax
from jax.experimental import pallas as pl
from jax.experimental.pallas import tpu as pltpu

_BN_EPS = 1e-5


def _bn_cols(z, eps=_BN_EPS):
    """Per-column BatchNorm (training mode, biased variance), single pass."""
    inv_n = 1.0 / z.shape[0]
    s1 = jnp.sum(z, axis=0, keepdims=True)
    s2 = jnp.sum(z * z, axis=0, keepdims=True)
    mu = s1 * inv_n
    var = jnp.maximum(s2 * inv_n - mu * mu, 0.0)
    return (z - mu) * lax.rsqrt(var + eps)


def _decoder_lstm_kernel(s0_ref, wg_ref, wfc_ref, gamma_ref, beta_ref,
                         out_ref, state_ref):
    H = gamma_ref.shape[1]
    D = wfc_ref.shape[1]
    G = 4 * H                       # gate width (== 128 for H=32)

    # Prime the carried state slab from the packed initial [x | hx | cx | pad].
    @pl.when(pl.program_id(0) == 0)
    def _():
        state_ref[...] = s0_ref[...]

    s = state_ref[...]                                  # (N, P)
    cx = s[:, D + H:D + 2 * H]                          # (N, H)

    # Fused gate matmul: [xh | hh] = [x|h|c|pad] @ Wg   (Wg block-structured).
    slab = jnp.dot(s, wg_ref[...],
                   preferred_element_type=jnp.float32)  # (N, 8H)

    # BatchNorm1d(affine=False), training mode, over the whole slab (columns
    # are independent => identical to bn_xh / bn_hh applied separately).
    slab_n = _bn_cols(slab)
    gates = slab_n[:, :G] + slab_n[:, G:]               # (N, 4H), vreg-aligned split

    # Full-width activations (EUP), select tanh for the cell-gate lanes.
    lane = lax.broadcasted_iota(jnp.int32, gates.shape, 1)
    is_cell = (lane >= 2 * H) & (lane < 3 * H)
    act = jnp.where(is_cell, jnp.tanh(gates), jax.nn.sigmoid(gates))

    ingate = act[:, 0:H]
    forgetgate = act[:, H:2 * H]
    cellgate = act[:, 2 * H:3 * H]
    outgate = act[:, 3 * H:4 * H]

    cy = cx * forgetgate + ingate * cellgate            # (N, H)

    # bn_c: BatchNorm1d(H), affine=True, training mode.
    cy_n = _bn_cols(cy) * gamma_ref[...] + beta_ref[...]
    hy = outgate * jnp.tanh(cy_n)                       # (N, H)

    # fc projection.  TODO(synk): training-mode Dropout(p=0.5) left as identity.
    next_x = jnp.dot(hy, wfc_ref[...],
                     preferred_element_type=jnp.float32)  # (N, D)

    # New state == packed per-step output [next_x | hy | cy | pad].
    state_ref[:, 0:D] = next_x
    state_ref[:, D:D + H] = hy
    state_ref[:, D + H:D + 2 * H] = cy
    out_ref[...] = state_ref[...]                        # one lane-dense slab store


def _pack_state(x, hx, cx, pad_width):
    n, d = x.shape
    h = hx.shape[1]
    s = jnp.zeros((n, pad_width), jnp.float32)
    s = s.at[:, :d].set(x.astype(jnp.float32))
    s = s.at[:, d:d + h].set(hx.astype(jnp.float32))
    s = s.at[:, d + h:d + 2 * h].set(cx.astype(jnp.float32))
    return s


def _pack_gate_weight(w_x2h, w_h2h, pad_width):
    d, g = w_x2h.shape          # (D, 4H)
    h = w_h2h.shape[0]
    wg = jnp.zeros((pad_width, 2 * g), jnp.float32)
    wg = wg.at[:d, :g].set(w_x2h.astype(jnp.float32))
    wg = wg.at[d:d + h, g:].set(w_h2h.astype(jnp.float32))
    return wg


def decoder_lstm_decode(x, hx, cx, w_x2h, w_h2h, w_fc, gamma_c, beta_c,
                        num_steps=1):
    """Run `num_steps` Decoder_LSTM forward steps in one pallas_call.

    Step t uses x_t = next_x_{t-1} (autoregressive decode); step 0 uses `x`.
    Returns (next_x (T,N,D), hy (T,N,H), cy (T,N,H)).
    """
    N, D = x.shape
    H = hx.shape[1]
    G = 4 * H
    P = max(128, ((D + 2 * H + 127) // 128) * 128)   # lane-dense slab width

    s0 = _pack_state(x, hx, cx, P)
    wg = _pack_gate_weight(w_x2h, w_h2h, P)
    wfc = w_fc.astype(jnp.float32)
    gamma2 = gamma_c.reshape(1, H).astype(jnp.float32)
    beta2 = beta_c.reshape(1, H).astype(jnp.float32)

    # Advisory cost estimate so XLA schedules this tiny call sensibly.
    flops = num_steps * (2 * N * P * 2 * G + 2 * N * H * D)
    transcendentals = num_steps * (2 * N * G + N * H + 2 * G + H)
    bytes_accessed = 4 * (N * P + P * 2 * G + H * D + 2 * H + num_steps * N * P)

    # NOTE(v7x): for many independent sequences, add a leading "parallel" grid
    # axis over sequences (each owning its full BN batch) to use both cores.
    out = pl.pallas_call(
        _decoder_lstm_kernel,
        out_shape=jax.ShapeDtypeStruct((num_steps, N, P), jnp.float32),
        grid_spec=pltpu.PrefetchScalarGridSpec(
            num_scalar_prefetch=0,
            grid=(num_steps,),
            in_specs=[
                pl.BlockSpec((N, P), lambda t: (0, 0)),        # packed init state
                pl.BlockSpec((P, 2 * G), lambda t: (0, 0)),    # fused gate weight
                pl.BlockSpec((H, D), lambda t: (0, 0)),        # fc weight
                pl.BlockSpec((1, H), lambda t: (0, 0)),        # bn_c gamma
                pl.BlockSpec((1, H), lambda t: (0, 0)),        # bn_c beta
            ],
            out_specs=pl.BlockSpec((None, N, P), lambda t: (t, 0, 0)),
            scratch_shapes=[pltpu.VMEM((N, P), jnp.float32)],  # carried state
        ),
        compiler_params=pltpu.CompilerParams(
            dimension_semantics=("arbitrary",)),
        cost_estimate=pl.CostEstimate(flops=flops,
                                      transcendentals=transcendentals,
                                      bytes_accessed=bytes_accessed),
    )(s0, wg, wfc, gamma2, beta2)

    next_x = out[:, :, :D]
    hy = out[:, :, D:D + H]
    cy = out[:, :, D + H:D + 2 * H]
    return next_x, hy, cy


def decoder_lstm_step(x, hx, cx, w_x2h, w_h2h, w_fc, gamma_c, beta_c):
    """Single Decoder_LSTM.forward step (matches the PyTorch module)."""
    nx, hy, cy = decoder_lstm_decode(x, hx, cx, w_x2h, w_h2h, w_fc,
                                     gamma_c, beta_c, num_steps=1)
    return nx[0], hy[0], cy[0]


def _reference_step(x, hx, cx, w_x2h, w_h2h, w_fc, gamma_c, beta_c):
    """Pure-JAX reference of Decoder_LSTM.forward (train-BN, eval-dropout)."""
    hp = jax.lax.Precision.HIGHEST

    def bn(z):
        mu = jnp.mean(z, axis=0, keepdims=True)
        var = jnp.mean((z - mu) ** 2, axis=0, keepdims=True)
        return (z - mu) / jnp.sqrt(var + _BN_EPS)

    H = hx.shape[1]
    gates = bn(jnp.dot(x, w_x2h, precision=hp)) + bn(jnp.dot(hx, w_h2h, precision=hp))
    i = jax.nn.sigmoid(gates[:, 0:H])
    f = jax.nn.sigmoid(gates[:, H:2 * H])
    c = jnp.tanh(gates[:, 2 * H:3 * H])
    o = jax.nn.sigmoid(gates[:, 3 * H:4 * H])
    cy = cx * f + i * c
    hy = o * jnp.tanh(bn(cy) * gamma_c + beta_c)
    nx = jnp.dot(hy, w_fc, precision=hp)
    return nx, hy, cy


if __name__ == "__main__":
    N, D, H = 8, 16, 32      # batch, output_size, hidden_size
    T = 8                    # decode steps fused into one pallas_call

    key = jax.random.PRNGKey(0)
    ks = jax.random.split(key, 8)

    x = jax.random.normal(ks[0], (N, D), jnp.float32)
    hx = jax.random.normal(ks[1], (N, H), jnp.float32)
    cx = jax.random.normal(ks[2], (N, H), jnp.float32)

    # Parameters: uniform(-std, std), std = 1/sqrt(hidden_size)  (reset_parameters).
    std = 1.0 / (H ** 0.5)
    w_x2h = jax.random.uniform(ks[3], (D, 4 * H), jnp.float32, -std, std)   # x2h.weight.T
    w_h2h = jax.random.uniform(ks[4], (H, 4 * H), jnp.float32, -std, std)   # h2h.weight.T
    w_fc = jax.random.uniform(ks[5], (H, D), jnp.float32, -std, std)        # fc.weight.T
    gamma_c = jax.random.uniform(ks[6], (1, H), jnp.float32, -std, std)     # bn_c.weight
    beta_c = jax.random.uniform(ks[7], (1, H), jnp.float32, -std, std)      # bn_c.bias

    # --- Single step (== Decoder_LSTM.forward) -------------------------------
    nx1, hy1, cy1 = decoder_lstm_step(x, hx, cx, w_x2h, w_h2h, w_fc, gamma_c, beta_c)
    jax.block_until_ready((nx1, hy1, cy1))
    assert nx1.shape == (N, D) and hy1.shape == (N, H) and cy1.shape == (N, H)

    rnx, rhy, rcy = _reference_step(x, hx, cx, w_x2h, w_h2h, w_fc, gamma_c, beta_c)
    assert jnp.allclose(nx1, rnx, atol=2e-2, rtol=2e-2)
    assert jnp.allclose(hy1, rhy, atol=2e-2, rtol=2e-2)
    assert jnp.allclose(cy1, rcy, atol=2e-2, rtol=2e-2)

    # --- Fused T-step autoregressive decode in one pallas_call ---------------
    nxT, hyT, cyT = decoder_lstm_decode(x, hx, cx, w_x2h, w_h2h, w_fc,
                                        gamma_c, beta_c, num_steps=T)
    jax.block_until_ready((nxT, hyT, cyT))
    assert nxT.shape == (T, N, D) and hyT.shape == (T, N, H) and cyT.shape == (T, N, H)

    rx, rh, rc = x, hx, cx
    for t in range(T):
        rx, rh, rc = _reference_step(rx, rh, rc, w_x2h, w_h2h, w_fc, gamma_c, beta_c)
        assert jnp.allclose(nxT[t], rx, atol=2e-2, rtol=2e-2)
        assert jnp.allclose(hyT[t], rh, atol=2e-2, rtol=2e-2)
        assert jnp.allclose(cyT[t], rc, atol=2e-2, rtol=2e-2)

    print("KERNEL_OK")
</pallas_src>

<mosaic_0001>
module attributes {stable_mosaic.version = 11 : i64} {
  func.func @_decoder_lstm_kernel(%arg0: i32, %arg1: memref<8x128xf32, #tpu.memory_space<vmem>>, %arg2: memref<128x256xf32, #tpu.memory_space<vmem>>, %arg3: memref<32x16xf32, #tpu.memory_space<vmem>>, %arg4: memref<1x32xf32, #tpu.memory_space<vmem>>, %arg5: memref<1x32xf32, #tpu.memory_space<vmem>>, %arg6: memref<1x8x128xf32, #tpu.memory_space<vmem>>, %arg7: memref<8x128xf32, #tpu.memory_space<vmem>>) attributes {dimension_semantics = [#tpu.dimension_semantics<arbitrary>], iteration_bounds = array<i64: 1>, scalar_prefetch = 0 : i64, scratch_operands = 1 : i64, tpu.core_type = #tpu.core_type<tc>, window_params = [{pipeline_mode = #tpu.pipeline_mode<synchronous>, transform_indices = @transform_0, window_bounds = array<i64: 8, 128>}, {pipeline_mode = #tpu.pipeline_mode<synchronous>, transform_indices = @transform_1, window_bounds = array<i64: 128, 256>}, {pipeline_mode = #tpu.pipeline_mode<synchronous>, transform_indices = @transform_2, window_bounds = array<i64: 32, 16>}, {pipeline_mode = #tpu.pipeline_mode<synchronous>, transform_indices = @transform_3, window_bounds = array<i64: 1, 32>}, {pipeline_mode = #tpu.pipeline_mode<synchronous>, transform_indices = @transform_4, window_bounds = array<i64: 1, 32>}, {transform_indices = @transform_5, window_bounds = array<i64: 1, 8, 128>}]} {
    %c0_i32 = arith.constant 0 : i32
    %0 = arith.cmpi eq, %arg0, %c0_i32 : i32
    %1 = arith.extui %0 : i1 to i32
    %c0_i32_0 = arith.constant 0 : i32
    %2 = arith.cmpi ne, %1, %c0_i32_0 : i32
    scf.if %2 {
      %c0_33 = arith.constant 0 : index
      %c0_34 = arith.constant 0 : index
      %87 = vector.load %arg1[%c0_33, %c0_34] : memref<8x128xf32, #tpu.memory_space<vmem>>, vector<8x128xf32>
      %c0_35 = arith.constant 0 : index
      %c0_36 = arith.constant 0 : index
      %88 = vector.load %arg7[%c0_35, %c0_36] : memref<8x128xf32, #tpu.memory_space<vmem>>, vector<8x128xf32>
      tpu.vector_store %arg7[%c0_35, %c0_36], %87 {strides = array<i32>} : memref<8x128xf32, #tpu.memory_space<vmem>>, vector<8x128xf32>,
    } else {
    }
    %c0 = arith.constant 0 : index
    %c0_1 = arith.constant 0 : index
    %3 = vector.load %arg7[%c0, %c0_1] : memref<8x128xf32, #tpu.memory_space<vmem>>, vector<8x128xf32>
    %4 = vector.extract_strided_slice %3 {offsets = [0, 48], sizes = [8, 32], strides = [1, 1]} : vector<8x128xf32> to vector<8x32xf32>
    %c0_2 = arith.constant 0 : index
    %c0_3 = arith.constant 0 : index
    %5 = vector.load %arg2[%c0_2, %c0_3] : memref<128x256xf32, #tpu.memory_space<vmem>>, vector<128x256xf32>
    %cst = arith.constant dense<0.000000e+00> : vector<8x256xf32>
    %6 = tpu.matmul %3, %5, %cst {dimension_numbers = #tpu.dot_dimension_numbers<[1], [0], [0], [1], [0, 0, 1, 1], [], []>} : vector<8x128xf32>, vector<128x256xf32>, vector<8x256xf32> -> vector<8x256xf32>
    %cst_4 = arith.constant dense<0.000000e+00> : vector<256xf32>
    %7 = vector.multi_reduction <add>, %6, %cst_4 [0] : vector<8x256xf32> to vector<256xf32>
    %8 = vector.shape_cast %7 : vector<256xf32> to vector<1x256xf32>
    %9 = arith.mulf %6, %6 : vector<8x256xf32>
    %cst_5 = arith.constant dense<0.000000e+00> : vector<256xf32>
    %10 = vector.multi_reduction <add>, %9, %cst_5 [0] : vector<8x256xf32> to vector<256xf32>
    %11 = vector.shape_cast %10 : vector<256xf32> to vector<1x256xf32>
    %cst_6 = arith.constant 1.250000e-01 : f32
    %12 = vector.broadcast %cst_6 : f32 to vector<1x256xf32>
    %13 = arith.mulf %8, %12 : vector<1x256xf32>
    %cst_7 = arith.constant 1.250000e-01 : f32
    %14 = vector.broadcast %cst_7 : f32 to vector<1x256xf32>
    %15 = arith.mulf %11, %14 : vector<1x256xf32>
    %16 = arith.mulf %13, %13 : vector<1x256xf32>
    %17 = arith.subf %15, %16 : vector<1x256xf32>
    %cst_8 = arith.constant 0.000000e+00 : f32
    %18 = vector.broadcast %cst_8 : f32 to vector<1x256xf32>
    %19 = arith.maximumf %17, %18 : vector<1x256xf32>
    %20 = vector.broadcast %13 : vector<1x256xf32> to vector<8x256xf32>
    %21 = arith.subf %6, %20 : vector<8x256xf32>
    %cst_9 = arith.constant 9.99999974E-6 : f32
    %22 = vector.broadcast %cst_9 : f32 to vector<1x256xf32>
    %23 = arith.addf %19, %22 : vector<1x256xf32>
    %24 = math.rsqrt %23 : vector<1x256xf32>
    %25 = vector.broadcast %24 : vector<1x256xf32> to vector<8x256xf32>
    %26 = arith.mulf %21, %25 : vector<8x256xf32>
    %27 = vector.extract_strided_slice %26 {offsets = [0, 0], sizes = [8, 128], strides = [1, 1]} : vector<8x256xf32> to vector<8x128xf32>
    %28 = vector.extract_strided_slice %26 {offsets = [0, 128], sizes = [8, 128], strides = [1, 1]} : vector<8x256xf32> to vector<8x128xf32>
    %29 = arith.addf %27, %28 : vector<8x128xf32>
    %30 = tpu.iota {dimensions = array<i32: 1>} : vector<8x128xi32>
    %c64_i32 = arith.constant 64 : i32
    %31 = vector.broadcast %c64_i32 : i32 to vector<8x128xi32>
    %32 = arith.cmpi sge, %30, %31 : vector<8x128xi32>
    %c96_i32 = arith.constant 96 : i32
    %33 = vector.broadcast %c96_i32 : i32 to vector<8x128xi32>
    %34 = arith.cmpi slt, %30, %33 : vector<8x128xi32>
    %35 = arith.andi %32, %34 : vector<8x128xi1>
    %36 = math.tanh %29 : vector<8x128xf32>
    %37 = arith.negf %29 : vector<8x128xf32>
    %38 = math.exp %37 : vector<8x128xf32>
    %cst_10 = arith.constant 1.000000e+00 : f32
    %39 = vector.broadcast %cst_10 : f32 to vector<8x128xf32>
    %40 = arith.addf %39, %38 : vector<8x128xf32>
    %41 = arith.divf %39, %40 : vector<8x128xf32>
    %42 = arith.select %35, %36, %41 : vector<8x128xi1>, vector<8x128xf32>
    %43 = vector.extract_strided_slice %42 {offsets = [0, 0], sizes = [8, 32], strides = [1, 1]} : vector<8x128xf32> to vector<8x32xf32>
    %44 = vector.extract_strided_slice %42 {offsets = [0, 32], sizes = [8, 32], strides = [1, 1]} : vector<8x128xf32> to vector<8x32xf32>
    %45 = vector.extract_strided_slice %42 {offsets = [0, 64], sizes = [8, 32], strides = [1, 1]} : vector<8x128xf32> to vector<8x32xf32>
    %46 = vector.extract_strided_slice %42 {offsets = [0, 96], sizes = [8, 32], strides = [1, 1]} : vector<8x128xf32> to vector<8x32xf32>
    %47 = arith.mulf %4, %44 : vector<8x32xf32>
    %48 = arith.mulf %43, %45 : vector<8x32xf32>
    %49 = arith.addf %47, %48 : vector<8x32xf32>
    %cst_11 = arith.constant dense<0.000000e+00> : vector<32xf32>
    %50 = vector.multi_reduction <add>, %49, %cst_11 [0] : vector<8x32xf32> to vector<32xf32>
    %51 = vector.shape_cast %50 : vector<32xf32> to vector<1x32xf32>
    %52 = arith.mulf %49, %49 : vector<8x32xf32>
    %cst_12 = arith.constant dense<0.000000e+00> : vector<32xf32>
    %53 = vector.multi_reduction <add>, %52, %cst_12 [0] : vector<8x32xf32> to vector<32xf32>
    %54 = vector.shape_cast %53 : vector<32xf32> to vector<1x32xf32>
    %cst_13 = arith.constant 1.250000e-01 : f32
    %55 = vector.broadcast %cst_13 : f32 to vector<1x32xf32>
    %56 = arith.mulf %51, %55 : vector<1x32xf32>
    %cst_14 = arith.constant 1.250000e-01 : f32
    %57 = vector.broadcast %cst_14 : f32 to vector<1x32xf32>
    %58 = arith.mulf %54, %57 : vector<1x32xf32>
    %59 = arith.mulf %56, %56 : vector<1x32xf32>
    %60 = arith.subf %58, %59 : vector<1x32xf32>
    %cst_15 = arith.constant 0.000000e+00 : f32
    %61 = vector.broadcast %cst_15 : f32 to vector<1x32xf32>
    %62 = arith.maximumf %60, %61 : vector<1x32xf32>
    %63 = vector.broadcast %56 : vector<1x32xf32> to vector<8x32xf32>
    %64 = arith.subf %49, %63 : vector<8x32xf32>
    %cst_16 = arith.constant 9.99999974E-6 : f32
    %65 = vector.broadcast %cst_16 : f32 to vector<1x32xf32>
    %66 = arith.addf %62, %65 : vector<1x32xf32>
    %67 = math.rsqrt %66 : vector<1x32xf32>
    %68 = vector.broadcast %67 : vector<1x32xf32> to vector<8x32xf32>
    %69 = arith.mulf %64, %68 : vector<8x32xf32>
    %c0_17 = arith.constant 0 : index
    %c0_18 = arith.constant 0 : index
    %70 = vector.load %arg4[%c0_17, %c0_18] : memref<1x32xf32, #tpu.memory_space<vmem>>, vector<1x32xf32>
    %71 = vector.broadcast %70 : vector<1x32xf32> to vector<8x32xf32>
    %72 = arith.mulf %69, %71 : vector<8x32xf32>
    %c0_19 = arith.constant 0 : index
    %c0_20 = arith.constant 0 : index
    %73 = vector.load %arg5[%c0_19, %c0_20] : memref<1x32xf32, #tpu.memory_space<vmem>>, vector<1x32xf32>
    %74 = vector.broadcast %73 : vector<1x32xf32> to vector<8x32xf32>
    %75 = arith.addf %72, %74 : vector<8x32xf32>
    %76 = math.tanh %75 : vector<8x32xf32>
    %77 = arith.mulf %46, %76 : vector<8x32xf32>
    %c0_21 = arith.constant 0 : index
    %c0_22 = arith.constant 0 : index
    %78 = vector.load %arg3[%c0_21, %c0_22] : memref<32x16xf32, #tpu.memory_space<vmem>>, vector<32x16xf32>
    %cst_23 = arith.constant dense<0.000000e+00> : vector<8x16xf32>
    %79 = tpu.matmul %77, %78, %cst_23 {dimension_numbers = #tpu.dot_dimension_numbers<[1], [0], [0], [1], [0, 0, 1, 1], [], []>} : vector<8x32xf32>, vector<32x16xf32>, vector<8x16xf32> -> vector<8x16xf32>
    %c0_24 = arith.constant 0 : index
    %c0_25 = arith.constant 0 : index
    %80 = vector.load %arg7[%c0_24, %c0_25] : memref<8x128xf32, #tpu.memory_space<vmem>>, vector<8x16xf32>
    tpu.vector_store %arg7[%c0_24, %c0_25], %79 {strides = array<i32>} : memref<8x128xf32, #tpu.memory_space<vmem>>, vector<8x16xf32>,
    %c0_26 = arith.constant 0 : index
    %c16 = arith.constant 16 : index
    %81 = vector.load %arg7[%c0_26, %c16] : memref<8x128xf32, #tpu.memory_space<vmem>>, vector<8x32xf32>
    tpu.vector_store %arg7[%c0_26, %c16], %77 {strides = array<i32>} : memref<8x128xf32, #tpu.memory_space<vmem>>, vector<8x32xf32>,
    %c0_27 = arith.constant 0 : index
    %c48 = arith.constant 48 : index
    %82 = vector.load %arg7[%c0_27, %c48] : memref<8x128xf32, #tpu.memory_space<vmem>>, vector<8x32xf32>
    tpu.vector_store %arg7[%c0_27, %c48], %49 {strides = array<i32>} : memref<8x128xf32, #tpu.memory_space<vmem>>, vector<8x32xf32>,
    %c0_28 = arith.constant 0 : index
    %c0_29 = arith.constant 0 : index
    %83 = vector.load %arg7[%c0_28, %c0_29] : memref<8x128xf32, #tpu.memory_space<vmem>>, vector<8x128xf32>
    %c0_30 = arith.constant 0 : index
    %c0_31 = arith.constant 0 : index
    %c0_32 = arith.constant 0 : index
    %84 = vector.load %arg6[%c0_30, %c0_31, %c0_32] : memref<1x8x128xf32, #tpu.memory_space<vmem>>, vector<1x8x128xf32>
    %85 = vector.shape_cast %84 : vector<1x8x128xf32> to vector<8x128xf32>
    %86 = vector.shape_cast %83 : vector<8x128xf32> to vector<1x8x128xf32>
    tpu.vector_store %arg6[%c0_30, %c0_31, %c0_32], %86 {strides = array<i32>} : memref<1x8x128xf32, #tpu.memory_space<vmem>>, vector<1x8x128xf32>,
    return
  }
  func.func @transform_0(%arg0: i32) -> (i32, i32) {
    %c0_i32 = arith.constant 0 : i32
    %c0_i32_0 = arith.constant 0 : i32
    %c0_i32_1 = arith.constant 0 : i32
    return %c0_i32, %c0_i32_0 : i32, i32
  }
  func.func @transform_1(%arg0: i32) -> (i32, i32) {
    %c0_i32 = arith.constant 0 : i32
    %c0_i32_0 = arith.constant 0 : i32
    %c0_i32_1 = arith.constant 0 : i32
    return %c0_i32, %c0_i32_0 : i32, i32
  }
  func.func @transform_2(%arg0: i32) -> (i32, i32) {
    %c0_i32 = arith.constant 0 : i32
    %c0_i32_0 = arith.constant 0 : i32
    %c0_i32_1 = arith.constant 0 : i32
    return %c0_i32, %c0_i32_0 : i32, i32
  }
  func.func @transform_3(%arg0: i32) -> (i32, i32) {
    %c0_i32 = arith.constant 0 : i32
    %c0_i32_0 = arith.constant 0 : i32
    %c0_i32_1 = arith.constant 0 : i32
    return %c0_i32, %c0_i32_0 : i32, i32
  }
  func.func @transform_4(%arg0: i32) -> (i32, i32) {
    %c0_i32 = arith.constant 0 : i32
    %c0_i32_0 = arith.constant 0 : i32
    %c0_i32_1 = arith.constant 0 : i32
    return %c0_i32, %c0_i32_0 : i32, i32
  }
  func.func @transform_5(%arg0: i32) -> (i32, i32, i32) {
    %c0_i32 = arith.constant 0 : i32
    %c0_i32_0 = arith.constant 0 : i32
    %c0_i32_1 = arith.constant 0 : i32
    return %arg0, %c0_i32, %c0_i32_0 : i32, i32, i32
  }
}

</mosaic_0001>

<llo_original>
// kernel: tpu_custom_call.1
$region0: #{tpu_custom_call.1}
  #allocation0 [shape = 'u32[]', space=smem, size = 0x4, offset = 0x4, fixed_abs, tag = 'smem constant byte address 0x4 - core index']
  #allocation1 [shape = 'u32[144,128]{1,0:T(1,128)}', space=vmem, size = 0x12000, scoped, tag = 'internal scratch']
  #allocation2 [shape = 'f32[8,128]{1,0:T(8,128)}', space=vmem, size = 0x1000, scoped, tag = 'scratch operand']
  %s0 = inlined_call_operand.vmem [shape: f32[8,128], index: 0, kind: input, shape index: {}]
  %s1 = inlined_call_operand.hbm [shape: f32[128,256], index: 1, kind: input, shape index: {}]
  %s2 = inlined_call_operand.vmem [shape: f32[32,16], index: 2, kind: input, shape index: {}]
  %s3 = inlined_call_operand.vmem [shape: f32[1,32], index: 3, kind: input, shape index: {}]
  %s4 = inlined_call_operand.vmem [shape: f32[1,32], index: 4, kind: input, shape index: {}]
  %s5 = inlined_call_operand.hbm [shape: f32[1,8,128], index: 5, kind: output, shape index: {}]
  %s6 = sld [smem:[#allocation0]]
  $region38: #{tpu_custom_call.1} parent=0
    _
  %s8 = ssub.s32 1, %s6
  %s9 = scalar_select 0, %s8, %s6
  $region1: #{tpu_custom_call.1} parent=0
    #allocation3 [shape = 'u8[131072]{0}', space=vmem, size = 0x20000, scoped, tag = 'input window, operand 1, single buffered']
    #allocation4 [shape = 's32[1]{0}', space=sflag, size = 0x4, scoped, tag = 'scoped memory for tpu_custom_call.1']
    #allocation5 [shape = 's32[1]{0}', space=sflag, size = 0x4, scoped, tag = 'scoped memory for tpu_custom_call.1']
    #allocation6 [shape = 'u8[4096]{0}', space=vmem, size = 0x1000, scoped, tag = 'output window, operand 0, single buffered']
    %10 = vsyncpa [#allocation4], 0
    %11 = vsyncpa [#allocation5], 0
    // Predicated region
    $region2: #{tpu_custom_call.1} parent=1 // pred_check
      _
    $region3: #{tpu_custom_call.1} parent=1 // pred_check_branch
      %13 = sbr.rel (0) target = $region5
    $region4: #{tpu_custom_call.1} parent=1 // pred_region
      _
    $region5: #{tpu_custom_call.1} parent=1 // pred_fallthru
      _
    // Predicated region
    $region6: #{tpu_custom_call.1} parent=1 // pred_check
      _
    $region7: #{tpu_custom_call.1} parent=1 // pred_check_branch
      %15 = sbr.rel (0) target = $region9
    $region8: #{tpu_custom_call.1} parent=1 // pred_region
      %s17 = ssub.s32 4096, 4096
      %18 = vsyncadd [#allocation4], %s17
      %s19 = sshll.u32 [#allocation3], 4
      %s20 = int_to_ptr.vmem [resolvable:$true] %s19
      %25 = dma.hbm_to_vmem [thread:$0]  %s1, 4096, %s20, [#allocation4], 256, 256, 16
    $region9: #{tpu_custom_call.1} parent=1 // pred_fallthru
      _
    // Predicated region
    $region10: #{tpu_custom_call.1} parent=1 // pred_check
      _
    $region11: #{tpu_custom_call.1} parent=1 // pred_check_branch
      %27 = sbr.rel (0) target = $region13
    $region12: #{tpu_custom_call.1} parent=1 // pred_region
      _
    $region13: #{tpu_custom_call.1} parent=1 // pred_fallthru
      _
    // Predicated region
    $region14: #{tpu_custom_call.1} parent=1 // pred_check
      _
    $region15: #{tpu_custom_call.1} parent=1 // pred_check_branch
      %29 = sbr.rel (0) target = $region17
    $region16: #{tpu_custom_call.1} parent=1 // pred_region
      _
    $region17: #{tpu_custom_call.1} parent=1 // pred_fallthru
      _
    // Predicated region
    $region18: #{tpu_custom_call.1} parent=1 // pred_check
      _
    $region19: #{tpu_custom_call.1} parent=1 // pred_check_branch
      %31 = sbr.rel (0) target = $region21
    $region20: #{tpu_custom_call.1} parent=1 // pred_region
      _
    $region21: #{tpu_custom_call.1} parent=1 // pred_fallthru
      _
    // Predicated region
    $region22: #{tpu_custom_call.1} parent=1 // pred_check
      _
    $region23: #{tpu_custom_call.1} parent=1 // pred_check_branch
      %33 = sbr.rel (0) target = $region25
    $region24: #{tpu_custom_call.1} parent=1 // pred_region
      %34 = dma.done [#allocation4], 4096
    $region25: #{tpu_custom_call.1} parent=1 // pred_fallthru
      _
    %p35 = scmp.eq.s32.totalorder 0, 0
    // Predicated region
    $region26: #{tpu_custom_call.1} parent=1 // pred_check
      %p36 = pneg %p35
    $region27: #{tpu_custom_call.1} parent=1 // pred_check_branch
      %38 = sbr.rel (%p36) target = $region29
    $region28: #{tpu_custom_call.1} parent=1 // pred_region
      %v39 = vld [vmem:[%s0] sm:$0xff]
      %40 = vst [vmem:[#allocation2] sm:$0xff] %v39
    $region29: #{tpu_custom_call.1} parent=1 // pred_fallthru
      _
    %v41 = vld [vmem:[#allocation2] sm:$0xff]
    %v42 = vld [vmem:[#allocation3] sm:$0xff]
    %v43 = vld [vmem:[#allocation3 + $0x8] sm:$0xff]
    %v44 = vld [vmem:[#allocation3 + $0x10] sm:$0xff]
    %v45 = vld [vmem:[#allocation3 + $0x18] sm:$0xff]
    %v46 = vld [vmem:[#allocation3 + $0x20] sm:$0xff]
    %v47 = vld [vmem:[#allocation3 + $0x28] sm:$0xff]
    %v48 = vld [vmem:[#allocation3 + $0x30] sm:$0xff]
    %v49 = vld [vmem:[#allocation3 + $0x38] sm:$0xff]
    %v50 = vld [vmem:[#allocation3 + $0x40] sm:$0xff]
    %v51 = vld [vmem:[#allocation3 + $0x48] sm:$0xff]
    %v52 = vld [vmem:[#allocation3 + $0x50] sm:$0xff]
    %v53 = vld [vmem:[#allocation3 + $0x58] sm:$0xff]
    %v54 = vld [vmem:[#allocation3 + $0x60] sm:$0xff]
    %v55 = vld [vmem:[#allocation3 + $0x68] sm:$0xff]
    %v56 = vld [vmem:[#allocation3 + $0x70] sm:$0xff]
    %v57 = vld [vmem:[#allocation3 + $0x78] sm:$0xff]
    %v58 = vld [vmem:[#allocation3 + $0x80] sm:$0xff]
    %v59 = vld [vmem:[#allocation3 + $0x88] sm:$0xff]
    %v60 = vld [vmem:[#allocation3 + $0x90] sm:$0xff]
    %v61 = vld [vmem:[#allocation3 + $0x98] sm:$0xff]
    %v62 = vld [vmem:[#allocation3 + $0xa0] sm:$0xff]
    %v63 = vld [vmem:[#allocation3 + $0xa8] sm:$0xff]
    %v64 = vld [vmem:[#allocation3 + $0xb0] sm:$0xff]
    %v65 = vld [vmem:[#allocation3 + $0xb8] sm:$0xff]
    %v66 = vld [vmem:[#allocation3 + $0xc0] sm:$0xff]
    %v67 = vld [vmem:[#allocation3 + $0xc8] sm:$0xff]
    %v68 = vld [vmem:[#allocation3 + $0xd0] sm:$0xff]
    %v69 = vld [vmem:[#allocation3 + $0xd8] sm:$0xff]
    %v70 = vld [vmem:[#allocation3 + $0xe0] sm:$0xff]
    %v71 = vld [vmem:[#allocation3 + $0xe8] sm:$0xff]
    %v72 = vld [vmem:[#allocation3 + $0xf0] sm:$0xff]
    %v73 = vld [vmem:[#allocation3 + $0xf8] sm:$0xff]
    %74 = vmatprep.subr.mxu0 %v73
    %75 = vmatpush1.msra.mxu0 %v72
    %76 = vmatprep.subr.mxu0 %v71
    %77 = vmatpush1.msra.mxu0 %v70
    %78 = vmatprep.subr.mxu0 %v69
    %79 = vmatpush1.msra.mxu0 %v68
    %80 = vmatprep.subr.mxu0 %v67
    %81 = vmatpush1.msra.mxu0 %v66
    %82 = vmatprep.subr.mxu0 %v65
    %83 = vmatpush1.msra.mxu0 %v64
    %84 = vmatprep.subr.mxu0 %v63
    %85 = vmatpush1.msra.mxu0 %v62
    %86 = vmatprep.subr.mxu0 %v61
    %87 = vmatpush1.msra.mxu0 %v60
    %88 = vmatprep.subr.mxu0 %v59
    %89 = vmatpush1.msra.mxu0 %v58
    %90 = vmatprep.subr.mxu0 %v57
    %91 = vmatpush1.msra.mxu0 %v56
    %92 = vmatprep.subr.mxu0 %v55
    %93 = vmatpush1.msra.mxu0 %v54
    %94 = vmatprep.subr.mxu0 %v53
    %95 = vmatpush1.msra.mxu0 %v52
    %96 = vmatprep.subr.mxu0 %v51
    %97 = vmatpush1.msra.mxu0 %v50
    %98 = vmatprep.subr.mxu0 %v49
    %99 = vmatpush1.msra.mxu0 %v48
    %100 = vmatprep.subr.mxu0 %v47
    %101 = vmatpush1.msra.mxu0 %v46
    %102 = vmatprep.subr.mxu0 %v45
    %103 = vmatpush1.msra.mxu0 %v44
    %104 = vmatprep.subr.mxu0 %v43
    %105 = vmatpush1.msra.mxu0 %v42
    %106 = vmatprep.subr.mxu0 0.0
    %107 = vmatpush2.msra.mxu0 0.0
    %108 = vmatprep.subr.mxu0 0.0
    %109 = vmatpush2.msra.mxu0 0.0
    %110 = vmatprep.subr.mxu0 0.0
    %111 = vmatpush2.msra.mxu0 0.0
    %112 = vmatprep.subr.mxu0 0.0
    %113 = vmatpush2.msra.mxu0 0.0
    %114 = vmatprep.subr.mxu0 0.0
    %115 = vmatpush2.msra.mxu0 0.0
    %116 = vmatprep.subr.mxu0 0.0
    %117 = vmatpush2.msra.mxu0 0.0
    %118 = vmatprep.subr.mxu0 0.0
    %119 = vmatpush2.msra.mxu0 0.0
    %120 = vmatprep.subr.mxu0 0.0
    %121 = vmatpush2.msra.mxu0 0.0
    %122 = vmatprep.subr.mxu0 0.0
    %123 = vmatpush2.msra.mxu0 0.0
    %124 = vmatprep.subr.mxu0 0.0
    %125 = vmatpush2.msra.mxu0 0.0
    %126 = vmatprep.subr.mxu0 0.0
    %127 = vmatpush2.msra.mxu0 0.0
    %128 = vmatprep.subr.mxu0 0.0
    %129 = vmatpush2.msra.mxu0 0.0
    %130 = vmatprep.subr.mxu0 0.0
    %131 = vmatpush2.msra.mxu0 0.0
    %132 = vmatprep.subr.mxu0 0.0
    %133 = vmatpush2.msra.mxu0 0.0
    %134 = vmatprep.subr.mxu0 0.0
    %135 = vmatpush2.msra.mxu0 0.0
    %136 = vmatprep.subr.mxu0 0.0
    %137 = vmatpush2.msra.mxu0 0.0
    %138 = vmatprep.mubr.f32.mxu0 0.0
    %139 = vmatmul.mubr.f32.gmra.mxu0 %v41
    %v140 = vpop.f32.mrf.mxu0
    %v141 = vadd.f32 0.0, %v140
    %v142 = vpop.f32.mrf.mxu0
    %v143 = vadd.f32 0.0, %v142
    %144 = vdwg.mxu0
    %v145 = vrot.slane %v141, 4
    %v146 = vadd.f32 %v141, %v145
    %v147 = vrot.slane %v146, 2
    %v148 = vadd.f32 %v146, %v147
    %v149 = vrot.slane %v148, 1
    %v150 = vadd.f32 %v148, %v149
    %v151 = vrot.slane %v143, 4
    %v152 = vadd.f32 %v143, %v151
    %v153 = vrot.slane %v152, 2
    %v154 = vadd.f32 %v152, %v153
    %v155 = vrot.slane %v154, 1
    %v156 = vadd.f32 %v154, %v155
    %v157 = vmul.f32 %v141, %v141
    %v158 = vmul.f32 %v143, %v143
    %v159 = vrot.slane %v157, 4
    %v160 = vadd.f32 %v157, %v159
    %v161 = vrot.slane %v160, 2
    %v162 = vadd.f32 %v160, %v161
    %v163 = vrot.slane %v162, 1
    %v164 = vadd.f32 %v162, %v163
    %v165 = vrot.slane %v158, 4
    %v166 = vadd.f32 %v158, %v165
    %v167 = vrot.slane %v166, 2
    %v168 = vadd.f32 %v166, %v167
    %v169 = vrot.slane %v168, 1
    %v170 = vadd.f32 %v168, %v169
    %v171 = vmul.f32 %v150, 0.125
    %v172 = vmul.f32 %v156, 0.125
    %v173 = vmul.f32 %v164, 0.125
    %v174 = vmul.f32 %v170, 0.125
    %v175 = vmul.f32 %v171, %v171
    %v176 = vmul.f32 %v172, %v172
    %v177 = vsub.f32 %v173, %v175
    %v178 = vsub.f32 %v174, %v176
    %v179 = vmax.f32 %v177, 0.0
    %v180 = vmax.f32 %v178, 0.0
    %v181 = vsub.f32 %v141, %v171
    %v182 = vsub.f32 %v143, %v172
    %v183 = vadd.f32 %v179, 1e-05
    %v184 = vadd.f32 %v180, 1e-05
    %v185 = vrsqrt.pop %v183
    %v186 = vrsqrt.pop %v184
    %v187 = vmul.f32 %v181, %v185
    %v188 = vmul.f32 %v182, %v186
    %v189 = vadd.f32 %v187, %v188
    %v190 = vlaneseq
    %v191 = vand.u32 %v190, 127
    %vm192 = vcmp.ge.s32.totalorder %v191, 64
    %vm193 = vcmp.lt.s32.totalorder %v191, 96
    %vm194 = vmand %vm192, %vm193
    %v195 = vtanh.pop %v189
    %v196 = vxor.u32 %v189, 2147483648
    %v197 = vmul.f32 %v196, 1.442695
    %v198 = vpow.pop %v197
    %v199 = vadd.f32 %v198, 1.0
    %v200 = vrcp.pop %v199
    %v201 = vmul.f32 1.0, %v200
    %v202 = vsel %vm194, %v195, %v201
    %204 = vrot.lane.b32.xlu0 %v202, 16
    %v205 = vpop.permute.xlu0 %204
    %v207 = vmul.f32 %v41, %v205
    %208 = vrot.lane.b32.xlu0 %v202, 64
    %v209 = vpop.permute.xlu0 %208
    %v211 = vmul.f32 %v202, %v209
    %213 = vrot.lane.b32.xlu0 %v211, 48
    %v214 = vpop.permute.xlu0 %213
    %v216 = vadd.f32 %v207, %v214
    %vm217 = vcmask 654720
    %v218 = vsel %vm217, %v216, 0.0
    %v219 = vrot.slane %v218, 4
    %v220 = vadd.f32 %v218, %v219
    %v221 = vrot.slane %v220, 2
    %v222 = vadd.f32 %v220, %v221
    %v223 = vrot.slane %v222, 1
    %v224 = vadd.f32 %v222, %v223
    %v225 = vmul.f32 %v216, %v216
    %v226 = vsel %vm217, %v225, 0.0
    %v227 = vrot.slane %v226, 4
    %v228 = vadd.f32 %v226, %v227
    %v229 = vrot.slane %v228, 2
    %v230 = vadd.f32 %v228, %v229
    %v231 = vrot.slane %v230, 1
    %v232 = vadd.f32 %v230, %v231
    %v233 = vmul.f32 %v224, 0.125
    %v234 = vmul.f32 %v232, 0.125
    %v235 = vmul.f32 %v233, %v233
    %v236 = vsub.f32 %v234, %v235
    %v237 = vmax.f32 %v236, 0.0
    %v238 = vsub.f32 %v216, %v233
    %v239 = vadd.f32 %v237, 1e-05
    %v240 = vrsqrt.pop %v239
    %v241 = vmul.f32 %v238, %v240
    %v242 = vld [vmem:[%s3] sm:$0x1]
    %v244 = vlaneseq
    %v245 = vshrl.u32 %v244, 7
    %v246 = vsub.s32 0, %v245
    %v247 = vrot.slane %v242, %v246
    %248 = vrot.lane.b32.xlu0 %v247, 48
    %v249 = vpop.permute.xlu0 %248
    %v251 = vmul.f32 %v241, %v249
    %v252 = vld [vmem:[%s4] sm:$0x1]
    %v254 = vlaneseq
    %v255 = vshrl.u32 %v254, 7
    %v256 = vsub.s32 0, %v255
    %v257 = vrot.slane %v252, %v256
    %258 = vrot.lane.b32.xlu0 %v257, 48
    %v259 = vpop.permute.xlu0 %258
    %v261 = vadd.f32 %v251, %v259
    %v262 = vtanh.pop %v261
    %264 = vrot.lane.b32.xlu0 %v262, 48
    %v265 = vpop.permute.xlu0 %264
    %v267 = vmul.f32 %v202, %v265
    %v268 = vld [vmem:[%s2] sm:$0xff]
    %v269 = vld [vmem:[%s2 + $0x8] sm:$0xff]
    %v270 = vld [vmem:[%s2 + $0x10] sm:$0xff]
    %v271 = vld [vmem:[%s2 + $0x18] sm:$0xff]
    %273 = vrot.lane.b32.xlu0 %v267, 32
    %v274 = vpop.permute.xlu0 %273
    %vm275 = vcmask 261120
    %v276 = vsel %vm275, %v274, 0
    %278 = vmatprep.subr.mxu0 0.0
    %279 = vmatpush1.msra.mxu0 0.0
    %280 = vmatprep.subr.mxu0 0.0
    %281 = vmatpush1.msra.mxu0 0.0
    %282 = vmatprep.subr.mxu0 0.0
    %283 = vmatpush1.msra.mxu0 0.0
    %284 = vmatprep.subr.mxu0 0.0
    %285 = vmatpush1.msra.mxu0 0.0
    %286 = vmatprep.subr.mxu0 0.0
    %287 = vmatpush1.msra.mxu0 0.0
    %288 = vmatprep.subr.mxu0 0.0
    %289 = vmatpush1.msra.mxu0 0.0
    %290 = vmatprep.subr.mxu0 0.0
    %291 = vmatpush1.msra.mxu0 0.0
    %292 = vmatprep.subr.mxu0 0.0
    %293 = vmatpush1.msra.mxu0 0.0
    %294 = vmatprep.subr.mxu0 0.0
    %295 = vmatpush1.msra.mxu0 0.0
    %296 = vmatprep.subr.mxu0 0.0
    %297 = vmatpush1.msra.mxu0 0.0
    %298 = vmatprep.subr.mxu0 0.0
    %299 = vmatpush1.msra.mxu0 0.0
    %300 = vmatprep.subr.mxu0 0.0
    %301 = vmatpush1.msra.mxu0 0.0
    %302 = vmatprep.subr.mxu0 0.0
    %303 = vmatpush1.msra.mxu0 %v271
    %304 = vmatprep.subr.mxu0 0.0
    %305 = vmatpush1.msra.mxu0 %v270
    %306 = vmatprep.subr.mxu0 0.0
    %307 = vmatpush1.msra.mxu0 %v269
    %308 = vmatprep.subr.mxu0 0.0
    %309 = vmatpush1.msra.mxu0 %v268
    %310 = vmatprep.subr.mxu0 0.0
    %311 = vmatpush2.msra.mxu0 0.0
    %312 = vmatprep.subr.mxu0 0.0
    %313 = vmatpush2.msra.mxu0 0.0
    %314 = vmatprep.subr.mxu0 0.0
    %315 = vmatpush2.msra.mxu0 0.0
    %316 = vmatprep.subr.mxu0 0.0
    %317 = vmatpush2.msra.mxu0 0.0
    %318 = vmatprep.subr.mxu0 0.0
    %319 = vmatpush2.msra.mxu0 0.0
    %320 = vmatprep.subr.mxu0 0.0
    %321 = vmatpush2.msra.mxu0 0.0
    %322 = vmatprep.subr.mxu0 0.0
    %323 = vmatpush2.msra.mxu0 0.0
    %324 = vmatprep.subr.mxu0 0.0
    %325 = vmatpush2.msra.mxu0 0.0
    %326 = vmatprep.subr.mxu0 0.0
    %327 = vmatpush2.msra.mxu0 0.0
    %328 = vmatprep.subr.mxu0 0.0
    %329 = vmatpush2.msra.mxu0 0.0
    %330 = vmatprep.subr.mxu0 0.0
    %331 = vmatpush2.msra.mxu0 0.0
    %332 = vmatprep.subr.mxu0 0.0
    %333 = vmatpush2.msra.mxu0 0.0
    %334 = vmatprep.subr.mxu0 0.0
    %335 = vmatpush2.msra.mxu0 0.0
    %336 = vmatprep.subr.mxu0 0.0
    %337 = vmatpush2.msra.mxu0 0.0
    %338 = vmatprep.subr.mxu0 0.0
    %339 = vmatpush2.msra.mxu0 0.0
    %340 = vmatprep.subr.mxu0 0.0
    %341 = vmatpush2.msra.mxu0 0.0
    %342 = vmatprep.mubr.f32.mxu0 0.0
    %343 = vmatmul.mubr.f32.gmra.mxu0 %v276
    %v344 = vpop.f32.mrf.mxu0
    %v345 = vadd.f32 0.0, %v344
    %v346 = vpop.f32.mrf.mxu0
    %347 = vdwg.mxu0
    %vm348 = vcmask 130048
    %349 = vst.msk [vmem:[#allocation2] sm:$0xff] %vm348, %v345
    %350 = vrot.lane.b32.xlu0 %v267, 48
    %v351 = vpop.permute.xlu0 %350
    %vm353 = vcmask 392320
    %354 = vst.msk [vmem:[#allocation2] sm:$0xff] %vm353, %v351
    %355 = vst.msk [vmem:[#allocation2] sm:$0xff] %vm217, %v216
    %v356 = vld [vmem:[#allocation2] sm:$0xff]
    %357 = vst [vmem:[#allocation6] sm:$0xff] %v356
    // Predicated region
    $region30: #{tpu_custom_call.1} parent=1 // pred_check
      _
    $region31: #{tpu_custom_call.1} parent=1 // pred_check_branch
      %359 = sbr.rel (0) target = $region33
    $region32: #{tpu_custom_call.1} parent=1 // pred_region
      %s361 = ssub.s32 128, 128
      %362 = vsyncadd [#allocation5], %s361
      %s364 = sshll.u32 [#allocation6], 4
      %s365 = int_to_ptr.vmem [resolvable:$true] %s364
      %367 = dma.vmem_to_hbm [thread:$0]  %s365, 128, %s5, [#allocation5]
    $region33: #{tpu_custom_call.1} parent=1 // pred_fallthru
      _
    // Predicated region
    $region34: #{tpu_custom_call.1} parent=1 // pred_check
      _
    $region35: #{tpu_custom_call.1} parent=1 // pred_check_branch
      %369 = sbr.rel (0) target = $region37
    $region36: #{tpu_custom_call.1} parent=1 // pred_region
      %370 = dma.done [#allocation5], 128
    $region37: #{tpu_custom_call.1} parent=1 // pred_fallthru
      _
    %371 = vsyncpa [#allocation4], 1
    %372 = vsyncpa [#allocation5], 1

</llo_original>
